<compile_context>
chip_gen: v5e
topology: v5e:2x2
jax: 0.10.0
libtpu: 0.0.40
codegen_flags: <defaults>
</compile_context>

<pallas_src>
import functools

import jax
import jax.numpy as jnp
from jax.experimental import pallas as pl
from jax.experimental.pallas import tpu as pltpu


def _conv1x1_add_mean_kernel(x_ref, w_ref, b_ref, other_ref, v2_ref, mean_ref,
                             *, cin, inv_count):
    # Channels-first layout:
    #   x_ref:     (Cin,  M)   zero-padded input pixels (M = N*Hout*Wout on lanes)
    #   w_ref:     (Cout, Cin) 1x1 conv weight
    #   b_ref:     (Cout, 1)   conv bias (broadcast over lanes)
    #   other_ref: (Cout, M)   tensor added to the conv output
    #   v2_ref:    (Cout, M)   output v2 = conv(x) + bias + other
    #   mean_ref:  (1, 1)      SMEM scalar: mean(v2)
    x = x_ref[...]
    w = w_ref[...]

    # Border pixels of the zero-padded 1x1 conv get bias (+ other) only; the
    # zero-padded x rows contribute 0 through the multiply-adds below.
    v2 = other_ref[...] + b_ref[...]

    # K=3, N=8 is far too small for the MXU (128x128 / 256x256): use an
    # unrolled VPU multiply-add over the input channels instead.
    for c in range(cin):
        v2 = v2 + w[:, c:c + 1] * x[c:c + 1, :]

    v2_ref[...] = v2
    # Fold the mean's 1/count into the kernel as a compile-time constant.
    mean_ref[0, 0] = jnp.sum(v2) * inv_count


@jax.jit
def conv1x1_pad_add_mean(x_nchw, weight, bias, other_nchw):
    """Pallas equivalent of:
         v1 = Conv2d(3, 8, kernel_size=1, stride=1, padding=1)(x1)
         v2 = v1 + other
         v3 = v2.mean()
         return (v3, v2)
    """
    n, cin, h, w = x_nchw.shape
    cout = weight.shape[0]
    hout, wout = h + 2, w + 2          # kernel=1, stride=1, padding=1
    m = n * hout * wout

    # Channels-first flattening: no NCHW<->NHWC transposes needed
    # (moveaxis over the size-1 batch axis is free).
    x_pad = jnp.pad(x_nchw, ((0, 0), (0, 0), (1, 1), (1, 1)))
    x_cm = jnp.moveaxis(x_pad, 1, 0).reshape(cin, m)            # (Cin,  M)
    other_cm = jnp.moveaxis(other_nchw, 1, 0).reshape(cout, m)  # (Cout, M)
    w_mat = weight.reshape(cout, cin).astype(jnp.float32)       # (Cout, Cin)
    b_col = bias.reshape(cout, 1).astype(jnp.float32)           # (Cout, 1)

    kernel = functools.partial(
        _conv1x1_add_mean_kernel,
        cin=cin,
        inv_count=1.0 / float(m * cout),
    )

    v2_cm, mean_out = pl.pallas_call(
        kernel,
        out_shape=(
            jax.ShapeDtypeStruct((cout, m), jnp.float32),
            jax.ShapeDtypeStruct((1, 1), jnp.float32),
        ),
        in_specs=[
            pl.BlockSpec(memory_space=pltpu.VMEM),
            pl.BlockSpec(memory_space=pltpu.VMEM),
            pl.BlockSpec(memory_space=pltpu.VMEM),
            pl.BlockSpec(memory_space=pltpu.VMEM),
        ],
        out_specs=(
            pl.BlockSpec(memory_space=pltpu.VMEM),
            pl.BlockSpec(memory_space=pltpu.SMEM),
        ),
    )(x_cm.astype(jnp.float32), w_mat, b_col, other_cm.astype(jnp.float32))

    v3 = mean_out[0, 0]
    v2 = jnp.moveaxis(v2_cm.reshape(cout, n, hout, wout), 0, 1)  # -> NCHW
    return v3, v2


if __name__ == "__main__":
    key = jax.random.PRNGKey(0)
    k_x, k_w, k_b, k_other = jax.random.split(key, 4)

    # Module: Conv2d(3, 8, kernel_size=1, stride=1, padding=1), input (1,3,5,5)
    # NOTE: the reference __init__ also builds models.resnet18(), which is
    # unused in forward (and `models` is not imported there) — skipped.
    n, cin, h, w = 1, 3, 5, 5
    cout = 8

    x1 = jax.random.normal(k_x, (n, cin, h, w), dtype=jnp.float32)
    weight = jax.random.normal(k_w, (cout, cin, 1, 1), dtype=jnp.float32) * 0.1
    bias = jax.random.normal(k_b, (cout,), dtype=jnp.float32) * 0.1
    # forward's `other = torch.randn(v1.shape)` -> deterministic stand-in
    # TODO(synk): live PyTorch re-samples `other` each forward; here it is a fixed input.
    other = jax.random.normal(k_other, (n, cout, h + 2, w + 2), dtype=jnp.float32)

    v3, v2 = conv1x1_pad_add_mean(x1, weight, bias, other)
    jax.block_until_ready((v3, v2))

    # Sanity check against a pure-JAX reference
    x_pad = jnp.pad(x1, ((0, 0), (0, 0), (1, 1), (1, 1)))
    v1_ref = (
        jnp.einsum("nchw,oc->nohw", x_pad, weight.reshape(cout, cin))
        + bias[None, :, None, None]
    )
    v2_ref = v1_ref + other
    v3_ref = jnp.mean(v2_ref)
    assert v2.shape == (n, cout, h + 2, w + 2)
    assert jnp.allclose(v2, v2_ref, atol=1e-5)
    assert jnp.allclose(v3, v3_ref, atol=1e-5)

    print("KERNEL_OK")
</pallas_src>

<mosaic_0001>
module attributes {stable_mosaic.version = 11 : i64} {
  func.func @_conv1x1_add_mean_kernel(%arg0: memref<3x49xf32, #tpu.memory_space<vmem>>, %arg1: memref<8x3xf32, #tpu.memory_space<vmem>>, %arg2: memref<8x1xf32, #tpu.memory_space<vmem>>, %arg3: memref<8x49xf32, #tpu.memory_space<vmem>>, %arg4: memref<8x49xf32, #tpu.memory_space<vmem>>, %arg5: memref<1x1xf32, #tpu.memory_space<smem>>) attributes {dimension_semantics = [], scalar_prefetch = 0 : i64, scratch_operands = 0 : i64, tpu.core_type = #tpu.core_type<tc>} {
    %c0 = arith.constant 0 : index
    %c0_0 = arith.constant 0 : index
    %0 = vector.load %arg0[%c0, %c0_0] : memref<3x49xf32, #tpu.memory_space<vmem>>, vector<3x49xf32>
    %c0_1 = arith.constant 0 : index
    %c0_2 = arith.constant 0 : index
    %1 = vector.load %arg1[%c0_1, %c0_2] : memref<8x3xf32, #tpu.memory_space<vmem>>, vector<8x3xf32>
    %c0_3 = arith.constant 0 : index
    %c0_4 = arith.constant 0 : index
    %2 = vector.load %arg3[%c0_3, %c0_4] : memref<8x49xf32, #tpu.memory_space<vmem>>, vector<8x49xf32>
    %c0_5 = arith.constant 0 : index
    %c0_6 = arith.constant 0 : index
    %3 = vector.load %arg2[%c0_5, %c0_6] : memref<8x1xf32, #tpu.memory_space<vmem>>, vector<8x1xf32>
    %4 = vector.broadcast %3 : vector<8x1xf32> to vector<8x49xf32>
    %5 = arith.addf %2, %4 : vector<8x49xf32>
    %6 = vector.extract_strided_slice %1 {offsets = [0, 0], sizes = [8, 1], strides = [1, 1]} : vector<8x3xf32> to vector<8x1xf32>
    %7 = vector.extract_strided_slice %0 {offsets = [0, 0], sizes = [1, 49], strides = [1, 1]} : vector<3x49xf32> to vector<1x49xf32>
    %8 = vector.broadcast %6 : vector<8x1xf32> to vector<8x49xf32>
    %9 = vector.broadcast %7 : vector<1x49xf32> to vector<8x49xf32>
    %10 = arith.mulf %8, %9 : vector<8x49xf32>
    %11 = arith.addf %5, %10 : vector<8x49xf32>
    %12 = vector.extract_strided_slice %1 {offsets = [0, 1], sizes = [8, 1], strides = [1, 1]} : vector<8x3xf32> to vector<8x1xf32>
    %13 = vector.extract_strided_slice %0 {offsets = [1, 0], sizes = [1, 49], strides = [1, 1]} : vector<3x49xf32> to vector<1x49xf32>
    %14 = vector.broadcast %12 : vector<8x1xf32> to vector<8x49xf32>
    %15 = vector.broadcast %13 : vector<1x49xf32> to vector<8x49xf32>
    %16 = arith.mulf %14, %15 : vector<8x49xf32>
    %17 = arith.addf %11, %16 : vector<8x49xf32>
    %18 = vector.extract_strided_slice %1 {offsets = [0, 2], sizes = [8, 1], strides = [1, 1]} : vector<8x3xf32> to vector<8x1xf32>
    %19 = vector.extract_strided_slice %0 {offsets = [2, 0], sizes = [1, 49], strides = [1, 1]} : vector<3x49xf32> to vector<1x49xf32>
    %20 = vector.broadcast %18 : vector<8x1xf32> to vector<8x49xf32>
    %21 = vector.broadcast %19 : vector<1x49xf32> to vector<8x49xf32>
    %22 = arith.mulf %20, %21 : vector<8x49xf32>
    %23 = arith.addf %17, %22 : vector<8x49xf32>
    %c0_7 = arith.constant 0 : index
    %c0_8 = arith.constant 0 : index
    %24 = vector.load %arg4[%c0_7, %c0_8] : memref<8x49xf32, #tpu.memory_space<vmem>>, vector<8x49xf32>
    tpu.vector_store %arg4[%c0_7, %c0_8], %23 {strides = array<i32>} : memref<8x49xf32, #tpu.memory_space<vmem>>, vector<8x49xf32>,
    %25 = vector.shape_cast %23 : vector<8x49xf32> to vector<1x8x49xf32>
    %cst = arith.constant dense<0.000000e+00> : vector<1xf32>
    %26 = vector.multi_reduction <add>, %25, %cst [1, 2] : vector<1x8x49xf32> to vector<1xf32>
    %27 = vector.shape_cast %26 : vector<1xf32> to vector<1x1x1xf32>
    %28 = vector.extract %27[0, 0, 0] : f32 from vector<1x1x1xf32>
    %cst_9 = arith.constant 0.00255102036 : f32
    %29 = arith.mulf %28, %cst_9 : f32
    %c0_10 = arith.constant 0 : index
    %c0_11 = arith.constant 0 : index
    %30 = memref.load %arg5[%c0_10, %c0_11] : memref<1x1xf32, #tpu.memory_space<smem>>
    memref.store %29, %arg5[%c0_10, %c0_11] : memref<1x1xf32, #tpu.memory_space<smem>>
    return
  }
}

</mosaic_0001>

<llo_original>
// kernel: conv1x1_pad_add_mean.1
$region0: #{conv1x1_pad_add_mean.1}
  #allocation0 [shape = 'u32[]', space=smem, size = 0x4, offset = 0x4, fixed_abs, tag = 'smem constant byte address 0x4 - core index']
  #allocation1 [shape = 'u32[72,128]{1,0:T(1,128)}', space=vmem, size = 0x9000, scoped, tag = 'internal scratch']
  %s0 = inlined_call_operand.vmem [shape: f32[3,49], index: 0, kind: input, shape index: {}]
  %s1 = inlined_call_operand.vmem [shape: f32[8,3], index: 1, kind: input, shape index: {}]
  %s2 = inlined_call_operand.vmem [shape: f32[8,1], index: 2, kind: input, shape index: {}]
  %s3 = inlined_call_operand.vmem [shape: f32[8,49], index: 3, kind: input, shape index: {}]
  %s4 = inlined_call_operand.vmem [shape: f32[8,49], index: 4, kind: output, shape index: {0}]
  %s5 = inlined_call_operand.hbm [shape: f32[1,1], index: 5, kind: output, shape index: {1}]
  %6 = xla_tuple %s4, %s5
  %s7 = sld [smem:[#allocation0]]
  $region34: #{conv1x1_pad_add_mean.1} parent=0
    _
  %s9 = ssub.s32 1, %s7
  %s10 = scalar_select 0, %s9, %s7
  $region1: #{conv1x1_pad_add_mean.1} parent=0
    #allocation2 [shape = 'u8[512]{0}', space=smem, size = 0x200, scoped, tag = 'output window, operand 1, single buffered']
    #allocation3 [shape = 's32[1]{0}', space=sflag, size = 0x4, scoped, tag = 'scoped memory for conv1x1_pad_add_mean.1']
    %11 = vsyncpa [#allocation3], 0
    // Predicated region
    $region2: #{conv1x1_pad_add_mean.1} parent=1 // pred_check
      _
    $region3: #{conv1x1_pad_add_mean.1} parent=1 // pred_check_branch
      %13 = sbr.rel (0) target = $region5
    $region4: #{conv1x1_pad_add_mean.1} parent=1 // pred_region
      _
    $region5: #{conv1x1_pad_add_mean.1} parent=1 // pred_fallthru
      _
    // Predicated region
    $region6: #{conv1x1_pad_add_mean.1} parent=1 // pred_check
      _
    $region7: #{conv1x1_pad_add_mean.1} parent=1 // pred_check_branch
      %15 = sbr.rel (0) target = $region9
    $region8: #{conv1x1_pad_add_mean.1} parent=1 // pred_region
      _
    $region9: #{conv1x1_pad_add_mean.1} parent=1 // pred_fallthru
      _
    // Predicated region
    $region10: #{conv1x1_pad_add_mean.1} parent=1 // pred_check
      _
    $region11: #{conv1x1_pad_add_mean.1} parent=1 // pred_check_branch
      %17 = sbr.rel (0) target = $region13
    $region12: #{conv1x1_pad_add_mean.1} parent=1 // pred_region
      _
    $region13: #{conv1x1_pad_add_mean.1} parent=1 // pred_fallthru
      _
    // Predicated region
    $region14: #{conv1x1_pad_add_mean.1} parent=1 // pred_check
      _
    $region15: #{conv1x1_pad_add_mean.1} parent=1 // pred_check_branch
      %19 = sbr.rel (0) target = $region17
    $region16: #{conv1x1_pad_add_mean.1} parent=1 // pred_region
      _
    $region17: #{conv1x1_pad_add_mean.1} parent=1 // pred_fallthru
      _
    %v20 = vld [vmem:[%s0] sm:$0x7]
    %v21 = vld [vmem:[%s1] sm:$0xff]
    %v22 = vld [vmem:[%s3] sm:$0xff]
    %v23 = vld [vmem:[%s2] sm:$0xff]
    %25 = vset.pattern.permute.xlu0 0
    %26 = vperm.xlu0 %25, %v23
    %v27 = vpop.permute.xlu0 %26
    %v29 = vadd.f32 %v22, %v27
    %31 = vset.pattern.permute.xlu0 0
    %32 = vperm.xlu0 %31, %v21
    %v33 = vpop.permute.xlu0 %32
    %v35 = vperm.slane %v20, 0
    %v36 = vmul.f32 %v33, %v35
    %v37 = vadd.f32 %v29, %v36
    %38 = vset.pattern.permute.xlu0 1
    %39 = vperm.xlu0 %38, %v21
    %v40 = vpop.permute.xlu0 %39
    %v42 = vperm.slane %v20, 1
    %v43 = vmul.f32 %v40, %v42
    %v44 = vadd.f32 %v37, %v43
    %45 = vset.pattern.permute.xlu0 2
    %46 = vperm.xlu0 %45, %v21
    %v47 = vpop.permute.xlu0 %46
    %v49 = vperm.slane %v20, 2
    %v50 = vmul.f32 %v47, %v49
    %v51 = vadd.f32 %v44, %v50
    %vm52 = vcmask 400384
    %53 = vst.msk [vmem:[%s4] sm:$0xff] %vm52, %v51
    %v54 = vsel %vm52, %v51, 0.0
    %55 = vadd.xlane.f32.xlu0 %v54
    %v56 = vpop.xlane.xlu0 %55
    %v57 = vrot.slane %v56, 4
    %v58 = vadd.f32 %v56, %v57
    %v59 = vrot.slane %v58, 2
    %v60 = vadd.f32 %v58, %v59
    %v61 = vrot.slane %v60, 1
    %v62 = vadd.f32 %v60, %v61
    %s63 = vtos %v62
    %s64 = smul.f32 %s63, 0.0025510204
    %s65 = scalar_lea.smem [#allocation2], 0
    %66 = sst [smem:[%s65]] %s64
    // Predicated region
    $region18: #{conv1x1_pad_add_mean.1} parent=1 // pred_check
      _
    $region19: #{conv1x1_pad_add_mean.1} parent=1 // pred_check_branch
      %68 = sbr.rel (0) target = $region21
    $region20: #{conv1x1_pad_add_mean.1} parent=1 // pred_region
      _
    $region21: #{conv1x1_pad_add_mean.1} parent=1 // pred_fallthru
      _
    // Predicated region
    $region22: #{conv1x1_pad_add_mean.1} parent=1 // pred_check
      _
    $region23: #{conv1x1_pad_add_mean.1} parent=1 // pred_check_branch
      %70 = sbr.rel (0) target = $region25
    $region24: #{conv1x1_pad_add_mean.1} parent=1 // pred_region
      %72 = vsyncadd [#allocation3], 0
      %s74 = sshll.u32 %s5, 4
      %s75 = int_to_ptr.hbm [resolvable:$true] %s74
      %77 = dma.smem_to_hbm [#allocation2], 16, %s75, [#allocation3]
    $region25: #{conv1x1_pad_add_mean.1} parent=1 // pred_fallthru
      _
    // Predicated region
    $region26: #{conv1x1_pad_add_mean.1} parent=1 // pred_check
      _
    $region27: #{conv1x1_pad_add_mean.1} parent=1 // pred_check_branch
      %79 = sbr.rel (0) target = $region29
    $region28: #{conv1x1_pad_add_mean.1} parent=1 // pred_region
      _
    $region29: #{conv1x1_pad_add_mean.1} parent=1 // pred_fallthru
      _
    // Predicated region
    $region30: #{conv1x1_pad_add_mean.1} parent=1 // pred_check
      _
    $region31: #{conv1x1_pad_add_mean.1} parent=1 // pred_check_branch
      %81 = sbr.rel (0) target = $region33
    $region32: #{conv1x1_pad_add_mean.1} parent=1 // pred_region
      %83 = dma.done [#allocation3], 16
    $region33: #{conv1x1_pad_add_mean.1} parent=1 // pred_fallthru
      _
    %84 = sfence
    %85 = vsyncpa [#allocation3], 1

</llo_original>
